<compile_context>
chip_gen: v5e
topology: v5e:2x2
jax: 0.10.0
libtpu: 0.0.40
codegen_flags: <defaults>
</compile_context>

<pallas_src>
import functools

import jax
import jax.numpy as jnp
from jax.experimental import pallas as pl
from jax.experimental.pallas import tpu as pltpu


def _layernorm_kernel(x_ref, alpha_ref, beta_ref, o_ref, *, eps, hidden):
    x = x_ref[...].astype(jnp.float32)               # (tile, H)

    # Single pass: both reductions issued back-to-back (overlap on the XLU).
    s1 = jnp.sum(x, axis=-1, keepdims=True)          # (tile, 1)
    s2 = jnp.sum(x * x, axis=-1, keepdims=True)      # (tile, 1)

    mu = s1 * (1.0 / hidden)
    # torch.std is the UNBIASED estimator (divides by N-1) by default.
    var = (s2 - mu * s1) / (hidden - 1)
    var = jnp.maximum(var, 0.0)
    sigma = jnp.sqrt(var)

    # Per-row reciprocal (tile ops) instead of a (tile, H)-wide VPU divide.
    # approx=False keeps full precision vs. the 1e-5 reference tolerance.
    inv = pl.reciprocal(sigma + eps, approx=False)   # (tile, 1)

    alpha = alpha_ref[...].astype(jnp.float32)       # (1, H)
    beta = beta_ref[...].astype(jnp.float32)         # (1, H)

    out = (x - mu) * inv * alpha + beta
    o_ref[...] = out.astype(o_ref.dtype)


def _pick_row_tile(rows, hidden, dtype_bytes, vmem_budget_bytes=48 * 1024 * 1024):
    """Largest sublane-aligned row tile whose double-buffered in+out footprint
    (2x input + 2x output tiles) fits a ~48 MiB budget — safe on v7x (64 MiB
    VMEM/TC) and comfortably within v5e/v6e (128 MiB)."""
    # Sublane packing: f32 -> 8 rows/vreg, bf16 -> 16, int8 -> 32.
    sublane = max(8, 32 // max(dtype_bytes, 1))
    per_row_bytes = 4 * hidden * dtype_bytes          # 2x in + 2x out buffers
    tile = vmem_budget_bytes // max(per_row_bytes, 1)
    tile = max(sublane, min(int(tile), 1024))         # diminishing returns past ~1K rows
    tile -= tile % sublane
    rows_up = ((rows + sublane - 1) // sublane) * sublane
    if tile > rows_up:
        tile = rows_up
    return int(tile)


def layer_norm(x, alpha, beta, eps=1e-4):
    """LayerNorm matching the PyTorch module.

    x:     (B, S, H)
    alpha: (1, 1, H)
    beta:  (1, 1, H)
    """
    B, S, H = x.shape
    rows = B * S
    x2 = x.reshape(rows, H)
    alpha2 = alpha.reshape(1, H)
    beta2 = beta.reshape(1, H)

    dtype_bytes = jnp.dtype(x.dtype).itemsize
    tile = _pick_row_tile(rows, H, dtype_bytes)

    # cdiv grid via explicit row padding (keeps the large tile for any B*S).
    num_blocks = -(-rows // tile)
    padded_rows = num_blocks * tile
    if padded_rows != rows:
        x2 = jnp.pad(x2, ((0, padded_rows - rows), (0, 0)))
    grid = (num_blocks,)

    # Scoped VMEM: actual footprint + headroom, kept under v7x's 64 MiB.
    footprint = 4 * tile * H * dtype_bytes + 4 * H * 4
    vmem_limit = int(min(56 * 1024 * 1024,
                         max(32 * 1024 * 1024, footprint + 4 * 1024 * 1024)))

    kernel = functools.partial(_layernorm_kernel, eps=eps, hidden=H)

    cost = pl.CostEstimate(
        flops=6 * rows * H,
        transcendentals=2 * rows,
        bytes_accessed=2 * rows * H * dtype_bytes + 2 * H * 4,
    )

    out = pl.pallas_call(
        kernel,
        out_shape=jax.ShapeDtypeStruct((padded_rows, H), x.dtype),
        grid_spec=pltpu.PrefetchScalarGridSpec(
            num_scalar_prefetch=0,
            grid=grid,
            in_specs=[
                pl.BlockSpec((tile, H), lambda i: (i, 0)),
                pl.BlockSpec((1, H), lambda i: (0, 0)),
                pl.BlockSpec((1, H), lambda i: (0, 0)),
            ],
            out_specs=pl.BlockSpec((tile, H), lambda i: (i, 0)),
        ),
        compiler_params=pltpu.CompilerParams(
            dimension_semantics=("parallel",),   # shards rows across v7x's 2 TCs
            vmem_limit_bytes=vmem_limit,
        ),
        cost_estimate=cost,
    )(x2, alpha2, beta2)

    if padded_rows != rows:
        out = out[:rows]
    return out.reshape(B, S, H)


def layer_norm_ref(x, alpha, beta, eps=1e-4):
    """Pure-JAX reference mirroring the PyTorch forward."""
    mu = jnp.mean(x, axis=2, keepdims=True)
    sigma = jnp.std(x, axis=2, keepdims=True, ddof=1)  # unbiased, like torch.std
    return (x - mu) / (sigma + eps) * alpha + beta


if __name__ == "__main__":
    B, S, H = 2, 8, 32
    key = jax.random.PRNGKey(0)
    x = jax.random.normal(key, (B, S, H), dtype=jnp.float32)

    # Deterministic parameter init matching nn.Module __init__:
    # alpha = ones(1, 1, H), beta = zeros(1, 1, H)
    alpha = jnp.ones((1, 1, H), dtype=jnp.float32)
    beta = jnp.zeros((1, 1, H), dtype=jnp.float32)

    out = layer_norm(x, alpha, beta, eps=1e-4)
    out = jax.block_until_ready(out)

    ref = layer_norm_ref(x, alpha, beta, eps=1e-4)
    assert out.shape == (B, S, H)
    assert jnp.allclose(out, ref, atol=1e-5, rtol=1e-5)

    print("KERNEL_OK")
</pallas_src>

<mosaic_0001>
module attributes {stable_mosaic.version = 11 : i64} {
  func.func @_layernorm_kernel(%arg0: i32, %arg1: memref<16x32xf32, #tpu.memory_space<vmem>>, %arg2: memref<1x32xf32, #tpu.memory_space<vmem>>, %arg3: memref<1x32xf32, #tpu.memory_space<vmem>>, %arg4: memref<16x32xf32, #tpu.memory_space<vmem>>) attributes {dimension_semantics = [#tpu.dimension_semantics<parallel>], iteration_bounds = array<i64: 1>, scalar_prefetch = 0 : i64, scratch_operands = 0 : i64, tpu.core_type = #tpu.core_type<tc>, window_params = [{transform_indices = @transform_0, window_bounds = array<i64: 16, 32>}, {pipeline_mode = #tpu.pipeline_mode<synchronous>, transform_indices = @transform_1, window_bounds = array<i64: 1, 32>}, {pipeline_mode = #tpu.pipeline_mode<synchronous>, transform_indices = @transform_2, window_bounds = array<i64: 1, 32>}, {transform_indices = @transform_3, window_bounds = array<i64: 16, 32>}]} {
    %c0 = arith.constant 0 : index
    %c0_0 = arith.constant 0 : index
    %0 = vector.load %arg1[%c0, %c0_0] : memref<16x32xf32, #tpu.memory_space<vmem>>, vector<16x32xf32>
    %cst = arith.constant dense<0.000000e+00> : vector<16xf32>
    %1 = vector.multi_reduction <add>, %0, %cst [1] : vector<16x32xf32> to vector<16xf32>
    %2 = vector.shape_cast %1 : vector<16xf32> to vector<16x1xf32>
    %3 = arith.mulf %0, %0 : vector<16x32xf32>
    %cst_1 = arith.constant dense<0.000000e+00> : vector<16xf32>
    %4 = vector.multi_reduction <add>, %3, %cst_1 [1] : vector<16x32xf32> to vector<16xf32>
    %5 = vector.shape_cast %4 : vector<16xf32> to vector<16x1xf32>
    %cst_2 = arith.constant 3.125000e-02 : f32
    %6 = vector.broadcast %cst_2 : f32 to vector<16x1xf32>
    %7 = arith.mulf %2, %6 : vector<16x1xf32>
    %8 = arith.mulf %7, %2 : vector<16x1xf32>
    %9 = arith.subf %5, %8 : vector<16x1xf32>
    %cst_3 = arith.constant 3.100000e+01 : f32
    %10 = vector.broadcast %cst_3 : f32 to vector<16x1xf32>
    %11 = arith.divf %9, %10 : vector<16x1xf32>
    %cst_4 = arith.constant 0.000000e+00 : f32
    %12 = vector.broadcast %cst_4 : f32 to vector<16x1xf32>
    %13 = arith.maximumf %11, %12 : vector<16x1xf32>
    %14 = math.sqrt %13 : vector<16x1xf32>
    %cst_5 = arith.constant 9.99999974E-5 : f32
    %15 = vector.broadcast %cst_5 : f32 to vector<16x1xf32>
    %16 = arith.addf %14, %15 : vector<16x1xf32>
    %17 = tpu.reciprocal %16 : vector<16x1xf32> -> vector<16x1xf32>
    %c0_6 = arith.constant 0 : index
    %c0_7 = arith.constant 0 : index
    %18 = vector.load %arg2[%c0_6, %c0_7] : memref<1x32xf32, #tpu.memory_space<vmem>>, vector<1x32xf32>
    %c0_8 = arith.constant 0 : index
    %c0_9 = arith.constant 0 : index
    %19 = vector.load %arg3[%c0_8, %c0_9] : memref<1x32xf32, #tpu.memory_space<vmem>>, vector<1x32xf32>
    %20 = vector.broadcast %7 : vector<16x1xf32> to vector<16x32xf32>
    %21 = arith.subf %0, %20 : vector<16x32xf32>
    %22 = vector.broadcast %17 : vector<16x1xf32> to vector<16x32xf32>
    %23 = arith.mulf %21, %22 : vector<16x32xf32>
    %24 = vector.broadcast %18 : vector<1x32xf32> to vector<16x32xf32>
    %25 = arith.mulf %23, %24 : vector<16x32xf32>
    %26 = vector.broadcast %19 : vector<1x32xf32> to vector<16x32xf32>
    %27 = arith.addf %25, %26 : vector<16x32xf32>
    %c0_10 = arith.constant 0 : index
    %c0_11 = arith.constant 0 : index
    %28 = vector.load %arg4[%c0_10, %c0_11] : memref<16x32xf32, #tpu.memory_space<vmem>>, vector<16x32xf32>
    tpu.vector_store %arg4[%c0_10, %c0_11], %27 {strides = array<i32>} : memref<16x32xf32, #tpu.memory_space<vmem>>, vector<16x32xf32>,
    return
  }
  func.func @transform_0(%arg0: i32) -> (i32, i32) {
    %c0_i32 = arith.constant 0 : i32
    %c0_i32_0 = arith.constant 0 : i32
    return %arg0, %c0_i32 : i32, i32
  }
  func.func @transform_1(%arg0: i32) -> (i32, i32) {
    %c0_i32 = arith.constant 0 : i32
    %c0_i32_0 = arith.constant 0 : i32
    %c0_i32_1 = arith.constant 0 : i32
    return %c0_i32, %c0_i32_0 : i32, i32
  }
  func.func @transform_2(%arg0: i32) -> (i32, i32) {
    %c0_i32 = arith.constant 0 : i32
    %c0_i32_0 = arith.constant 0 : i32
    %c0_i32_1 = arith.constant 0 : i32
    return %c0_i32, %c0_i32_0 : i32, i32
  }
  func.func @transform_3(%arg0: i32) -> (i32, i32) {
    %c0_i32 = arith.constant 0 : i32
    %c0_i32_0 = arith.constant 0 : i32
    return %arg0, %c0_i32 : i32, i32
  }
}

</mosaic_0001>

<llo_original>
// kernel: tpu_custom_call.1
$region0: #{tpu_custom_call.1}
  #allocation0 [shape = 'u32[]', space=smem, size = 0x4, offset = 0x4, fixed_abs, tag = 'smem constant byte address 0x4 - core index']
  #allocation1 [shape = 'u32[72,128]{1,0:T(1,128)}', space=vmem, size = 0x9000, scoped, tag = 'internal scratch']
  %s0 = inlined_call_operand.hbm [shape: f32[16,32], index: 0, kind: input, shape index: {}]
  %s1 = inlined_call_operand.hbm [shape: f32[1,32], index: 1, kind: input, shape index: {}]
  %s2 = inlined_call_operand.vmem [shape: f32[1,32], index: 2, kind: input, shape index: {}]
  %s3 = inlined_call_operand.hbm [shape: f32[16,32], index: 3, kind: output, shape index: {}]
  %s4 = sld [smem:[#allocation0]]
  $region30: #{tpu_custom_call.1} parent=0
    _
  %s6 = ssub.s32 1, %s4
  %s7 = scalar_select 0, %s6, %s4
  $region1: #{tpu_custom_call.1} parent=0
    #allocation2 [shape = 'u8[8192]{0}', space=vmem, size = 0x2000, scoped, tag = 'input window, operand 0, single buffered']
    #allocation3 [shape = 's32[1]{0}', space=sflag, size = 0x4, scoped, tag = 'scoped memory for tpu_custom_call.1']
    #allocation4 [shape = 's32[1]{0}', space=sflag, size = 0x4, scoped, tag = 'scoped memory for tpu_custom_call.1']
    #allocation5 [shape = 'u8[512]{0}', space=vmem, size = 0x400, scoped, tag = 'input window, operand 1, single buffered']
    #allocation6 [shape = 's32[1]{0}', space=sflag, size = 0x4, scoped, tag = 'scoped memory for tpu_custom_call.1']
    #allocation7 [shape = 'u8[8192]{0}', space=vmem, size = 0x2000, scoped, tag = 'output window, operand 0, single buffered']
    %8 = vsyncpa [#allocation3], 0
    %9 = vsyncpa [#allocation6], 0
    %10 = vsyncpa [#allocation4], 0
    // Predicated region
    $region2: #{tpu_custom_call.1} parent=1 // pred_check
      _
    $region3: #{tpu_custom_call.1} parent=1 // pred_check_branch
      %12 = sbr.rel (0) target = $region5
    $region4: #{tpu_custom_call.1} parent=1 // pred_region
      %14 = vsyncadd [#allocation3], 0
      %s15 = sshll.u32 %s0, 4
      %s16 = int_to_ptr.hbm [resolvable:$true] %s15
      %s17 = sshll.u32 [#allocation2], 4
      %s18 = int_to_ptr.vmem [resolvable:$true] %s17
      %23 = dma.hbm_to_vmem [thread:$0]  %s16, 256, %s18, [#allocation3], 128, 128, 8
    $region5: #{tpu_custom_call.1} parent=1 // pred_fallthru
      _
    // Predicated region
    $region6: #{tpu_custom_call.1} parent=1 // pred_check
      _
    $region7: #{tpu_custom_call.1} parent=1 // pred_check_branch
      %25 = sbr.rel (0) target = $region9
    $region8: #{tpu_custom_call.1} parent=1 // pred_region
      %27 = vsyncadd [#allocation6], 0
      %s29 = sshll.u32 %s1, 4
      %s30 = int_to_ptr.hbm [resolvable:$true] %s29
      %s31 = sshll.u32 [#allocation5], 4
      %s32 = int_to_ptr.vmem [resolvable:$true] %s31
      %34 = dma.hbm_to_vmem [thread:$0]  %s30, 16, %s32, [#allocation6]
    $region9: #{tpu_custom_call.1} parent=1 // pred_fallthru
      _
    // Predicated region
    $region10: #{tpu_custom_call.1} parent=1 // pred_check
      _
    $region11: #{tpu_custom_call.1} parent=1 // pred_check_branch
      %36 = sbr.rel (0) target = $region13
    $region12: #{tpu_custom_call.1} parent=1 // pred_region
      _
    $region13: #{tpu_custom_call.1} parent=1 // pred_fallthru
      _
    // Predicated region
    $region14: #{tpu_custom_call.1} parent=1 // pred_check
      _
    $region15: #{tpu_custom_call.1} parent=1 // pred_check_branch
      %38 = sbr.rel (0) target = $region17
    $region16: #{tpu_custom_call.1} parent=1 // pred_region
      %40 = dma.done [#allocation3], 256
    $region17: #{tpu_custom_call.1} parent=1 // pred_fallthru
      _
    // Predicated region
    $region18: #{tpu_custom_call.1} parent=1 // pred_check
      _
    $region19: #{tpu_custom_call.1} parent=1 // pred_check_branch
      %42 = sbr.rel (0) target = $region21
    $region20: #{tpu_custom_call.1} parent=1 // pred_region
      %44 = dma.done [#allocation6], 16
    $region21: #{tpu_custom_call.1} parent=1 // pred_fallthru
      _
    %v45 = vld [vmem:[#allocation2] sm:$0xff]
    %v46 = vld [vmem:[#allocation2 + $0x8] sm:$0xff]
    %vm47 = vcmask 261120
    %v48 = vsel %vm47, %v45, 0.0
    %49 = vadd.xlane.f32.xlu0 %v48
    %v50 = vpop.xlane.xlu0 %49
    %v51 = vsel %vm47, %v46, 0.0
    %52 = vadd.xlane.f32.xlu0 %v51
    %v53 = vpop.xlane.xlu0 %52
    %v54 = vmul.f32 %v45, %v45
    %v55 = vmul.f32 %v46, %v46
    %v56 = vsel %vm47, %v54, 0.0
    %57 = vadd.xlane.f32.xlu0 %v56
    %v58 = vpop.xlane.xlu0 %57
    %v59 = vsel %vm47, %v55, 0.0
    %60 = vadd.xlane.f32.xlu0 %v59
    %v61 = vpop.xlane.xlu0 %60
    %v62 = vmul.f32 %v50, 0.03125
    %v63 = vmul.f32 %v53, 0.03125
    %v64 = vmul.f32 %v62, %v50
    %v65 = vmul.f32 %v63, %v53
    %v66 = vsub.f32 %v58, %v64
    %v67 = vsub.f32 %v61, %v65
    %v68 = vrcp.pop 31.0
    %v69 = vmul.f32 31.0, %v68
    %v70 = vsub.f32 1.0, %v69
    %v71 = vmul.f32 %v68, %v70
    %v72 = vadd.f32 %v68, %v71
    %vm73 = vweird.f32 %v68
    %v74 = vsel %vm73, %v68, %v72
    %v75 = vmul.f32 %v66, %v74
    %v76 = vmul.f32 %v67, %v74
    %v77 = vmax.f32 %v75, 0.0
    %v78 = vmax.f32 %v76, 0.0
    %v79 = vrsqrt.pop %v77
    %v80 = vmul.f32 %v79, %v77
    %v81 = vmul.f32 %v80, %v79
    %v82 = vmul.f32 0.5, %v81
    %v83 = vsub.f32 1.5, %v82
    %v84 = vmul.f32 %v79, %v83
    %v85 = vmul.f32 %v77, %v84
    %vm86 = vcmp.eq.f32.partialorder %v77, inf
    %v87 = vsel %vm86, %v77, %v85
    %vm88 = vcmp.eq.f32.partialorder %v77, 0.0
    %v89 = vand.u32 %v77, 2147483648
    %v90 = vsel %vm88, %v89, %v87
    %v91 = vrsqrt.pop %v78
    %v92 = vmul.f32 %v91, %v78
    %v93 = vmul.f32 %v92, %v91
    %v94 = vmul.f32 0.5, %v93
    %v95 = vsub.f32 1.5, %v94
    %v96 = vmul.f32 %v91, %v95
    %v97 = vmul.f32 %v78, %v96
    %vm98 = vcmp.eq.f32.partialorder %v78, inf
    %v99 = vsel %vm98, %v78, %v97
    %vm100 = vcmp.eq.f32.partialorder %v78, 0.0
    %v101 = vand.u32 %v78, 2147483648
    %v102 = vsel %vm100, %v101, %v99
    %v103 = vadd.f32 %v90, 0.0001
    %v104 = vadd.f32 %v102, 0.0001
    %v105 = vrcp.pop %v103
    %v106 = vmul.f32 %v103, %v105
    %v107 = vsub.f32 1.0, %v106
    %v108 = vmul.f32 %v105, %v107
    %v109 = vadd.f32 %v105, %v108
    %vm110 = vweird.f32 %v103
    %vm111 = vweird.f32 %v105
    %vm112 = vmor %vm110, %vm111
    %v113 = vsel %vm112, %v105, %v109
    %v114 = vand.u32 2147483647, %v103
    %vm115 = vcmp.eq.f32.partialorder %v114, 8.507059e+37
    %v116 = vand.u32 %v103, 2147483648
    %v117 = vor.u32 1.1754944e-38, %v116
    %v118 = vsel %vm115, %v117, %v113
    %v119 = vrcp.pop %v104
    %v120 = vmul.f32 %v104, %v119
    %v121 = vsub.f32 1.0, %v120
    %v122 = vmul.f32 %v119, %v121
    %v123 = vadd.f32 %v119, %v122
    %vm124 = vweird.f32 %v104
    %vm125 = vweird.f32 %v119
    %vm126 = vmor %vm124, %vm125
    %v127 = vsel %vm126, %v119, %v123
    %v128 = vand.u32 2147483647, %v104
    %vm129 = vcmp.eq.f32.partialorder %v128, 8.507059e+37
    %v130 = vand.u32 %v104, 2147483648
    %v131 = vor.u32 1.1754944e-38, %v130
    %v132 = vsel %vm129, %v131, %v127
    %v133 = vld [vmem:[#allocation5] sm:$0x1]
    %v134 = vld [vmem:[%s2] sm:$0x1]
    %v135 = vsub.f32 %v45, %v62
    %v136 = vsub.f32 %v46, %v63
    %v137 = vmul.f32 %v135, %v118
    %v138 = vmul.f32 %v136, %v132
    %v140 = vperm.slane %v133, 0
    %v142 = vmul.f32 %v137, %v140
    %v143 = vmul.f32 %v138, %v140
    %v145 = vperm.slane %v134, 0
    %v147 = vadd.f32 %v142, %v145
    %v148 = vadd.f32 %v143, %v145
    %149 = vst.msk [vmem:[#allocation7] sm:$0xff] %vm47, %v147
    %150 = vst.msk [vmem:[#allocation7 + $0x8] sm:$0xff] %vm47, %v148
    // Predicated region
    $region22: #{tpu_custom_call.1} parent=1 // pred_check
      _
    $region23: #{tpu_custom_call.1} parent=1 // pred_check_branch
      %152 = sbr.rel (0) target = $region25
    $region24: #{tpu_custom_call.1} parent=1 // pred_region
      %154 = vsyncadd [#allocation4], 0
      %s155 = sshll.u32 [#allocation7], 4
      %s156 = int_to_ptr.vmem [resolvable:$true] %s155
      %s157 = sshll.u32 %s3, 4
      %s158 = int_to_ptr.hbm [resolvable:$true] %s157
      %163 = dma.vmem_to_hbm [thread:$0]  %s156, 256, %s158, [#allocation4], 128, 128, 8
    $region25: #{tpu_custom_call.1} parent=1 // pred_fallthru
      _
    // Predicated region
    $region26: #{tpu_custom_call.1} parent=1 // pred_check
      _
    $region27: #{tpu_custom_call.1} parent=1 // pred_check_branch
      %165 = sbr.rel (0) target = $region29
    $region28: #{tpu_custom_call.1} parent=1 // pred_region
      %167 = dma.done [#allocation4], 256
    $region29: #{tpu_custom_call.1} parent=1 // pred_fallthru
      _
    %168 = vsyncpa [#allocation3], 1
    %169 = vsyncpa [#allocation6], 1
    %170 = vsyncpa [#allocation4], 1

</llo_original>
